<compile_context>
chip_gen: v7x
topology: tpu7x:2x2x1
jax: 0.10.0
libtpu: 0.0.40
codegen_flags: <defaults>
</compile_context>

<pallas_src>
import jax
import jax.numpy as jnp
from jax import lax
from jax.experimental import pallas as pl
from jax.experimental.pallas import tpu as pltpu

EPS = 1e-5  # nn.BatchNorm1d default eps


# --------------------------------------------------------------------------- #
# Generation-aware VMEM budgets
# --------------------------------------------------------------------------- #
def _vmem_budget():
    """Returns (per-step tile budget, vmem_limit_bytes) based on chip VMEM."""
    cap = 64 * 1024 * 1024  # conservative default (v7x per-TC VMEM)
    try:
        info = pltpu.get_tpu_info()
        cap = int(getattr(info, "vmem_capacity_bytes", cap) or cap)
    except Exception:
        pass
    if cap >= 96 * 1024 * 1024:                      # v5e / v6e (128 MiB VMEM)
        return 24 * 1024 * 1024, 64 * 1024 * 1024
    return 16 * 1024 * 1024, 48 * 1024 * 1024        # v7x / unknown


# --------------------------------------------------------------------------- #
# Tiling helpers
# --------------------------------------------------------------------------- #
def _pick_lane_tile(C, L, itemsize, budget):
    """Largest 128-multiple divisor of L whose per-step buffers fit `budget`.
    If L is not 128-aligned the only legal lane block is the full dim (caller
    pads when that does not fit)."""
    if L % 128 != 0:
        return L
    # VMEM bytes per lane-column of a (C, tL) tile (nB = 1):
    #   pass 2: double-buffered in + double-buffered out     -> 4*C*itemsize
    #   pass 1: double-buffered in + 2 f32 scratch (<= full)  -> C*(2*itemsize + 8)
    per_lane = max(4 * C * itemsize, C * (2 * itemsize + 8))
    max_tl = max(128, budget // max(per_lane, 1))
    m = L // 128
    for d in range(m, 0, -1):
        if m % d == 0 and 128 * d <= max_tl:
            return 128 * d
    return 128


def _pick_batch_block(N, C, tL, itemsize, budget):
    """Block several batch items per grid step when the (C, tL) tile is small,
    amortizing per-step overhead.  Capped at 8 to bound kernel unrolling."""
    tile_bytes = C * tL * itemsize
    if tile_bytes >= 512 * 1024:
        return 1
    scratch = 2 * C * tL * 4
    for nb in range(min(N, 8), 0, -1):
        if N % nb != 0:
            continue
        step1 = 2 * nb * tile_bytes + scratch        # stats pass
        step2 = 4 * nb * tile_bytes                  # apply pass
        if max(step1, step2) <= budget and nb * tile_bytes <= 2 * 1024 * 1024:
            return nb
    return 1


def _pick_fold(tL):
    """Lane-fold factor (2-4x) used to shrink accumulator RMW traffic."""
    for f in (4, 3, 2):
        if tL % (f * 128) == 0:
            return f
    return 1


# --------------------------------------------------------------------------- #
# Kernels
# --------------------------------------------------------------------------- #
def _make_stats_kernel(nB, fold):
    def kernel(x_ref, sum_ref, ssq_ref, acc_ref, acc2_ref):
        # x_ref: (nB, C, tL) native dtype
        # sum_ref / ssq_ref: (C, 1) f32 per-batch-block partial outputs
        # acc_ref / acc2_ref: (C, tL // fold) f32 VMEM scratch accumulators
        l_i = pl.program_id(1)

        @pl.when(l_i == 0)
        def _():
            acc_ref[...] = jnp.zeros_like(acc_ref)
            acc2_ref[...] = jnp.zeros_like(acc2_ref)

        # Fold over the batch axis first (pure VPU adds, no scratch RMW).
        x0 = x_ref[0].astype(jnp.float32)            # (C, tL)
        s = x0
        s2 = x0 * x0
        for bi in range(1, nB):
            xb = x_ref[bi].astype(jnp.float32)
            s = s + xb
            s2 = s2 + xb * xb

        # Fold 2-4x along lanes (static 128-aligned slices) before the single
        # read-modify-write into the narrow accumulators.
        if fold > 1:
            tF = s.shape[-1] // fold
            sf = s[:, :tF]
            s2f = s2[:, :tF]
            for fi in range(1, fold):
                sf = sf + s[:, fi * tF:(fi + 1) * tF]
                s2f = s2f + s2[:, fi * tF:(fi + 1) * tF]
        else:
            sf, s2f = s, s2

        acc_ref[...] += sf
        acc2_ref[...] += s2f

        # Single cross-lane (XLU) reduce, once per batch block.
        @pl.when(l_i == pl.num_programs(1) - 1)
        def _():
            sum_ref[...] = jnp.sum(acc_ref[...], axis=1, keepdims=True)
            ssq_ref[...] = jnp.sum(acc2_ref[...], axis=1, keepdims=True)

    return kernel


def _make_apply_kernel(nB):
    def kernel(x_ref, scale_ref, shift_ref, o_ref):
        # x_ref / o_ref: (nB, C, tL); scale_ref / shift_ref: (C, 1) f32
        scale = scale_ref[...]
        shift = shift_ref[...]
        for bi in range(nB):
            xb = x_ref[bi].astype(jnp.float32)
            o_ref[bi] = (xb * scale + shift).astype(o_ref.dtype)

    return kernel


def _make_fused_kernel(n_batch, eps, inv_count):
    def kernel(avec_ref, bg_ref, bb_ref, x_ref, o_ref):
        # avec_ref: (C,1) = alpha; bg_ref: (C,1) = beta*gamma; bb_ref: (C,1) = beta*bias
        # x_ref / o_ref: (N, C, L), fully resident in VMEM.
        x0 = x_ref[0].astype(jnp.float32)            # (C, L)
        s = x0
        s2 = x0 * x0
        for bi in range(1, n_batch):
            xb = x_ref[bi].astype(jnp.float32)
            s = s + xb
            s2 = s2 + xb * xb
        sum_c = jnp.sum(s, axis=-1, keepdims=True)   # (C, 1)
        ssq_c = jnp.sum(s2, axis=-1, keepdims=True)
        mean = sum_c * inv_count
        var = jnp.maximum(ssq_c * inv_count - mean * mean, 0.0)
        inv_std = lax.rsqrt(var + eps)
        gs = bg_ref[...] * inv_std                   # beta*gamma*inv_std
        scale = avec_ref[...] + gs
        shift = bb_ref[...] - mean * gs
        for bi in range(n_batch):
            xb = x_ref[bi].astype(jnp.float32)
            o_ref[bi] = (xb * scale + shift).astype(o_ref.dtype)

    return kernel


# --------------------------------------------------------------------------- #
# Forward implementations
# --------------------------------------------------------------------------- #
def _fused_forward(x, gamma, bias, alpha, beta, eps, limit):
    N, C, L = x.shape
    a = jnp.asarray(alpha, jnp.float32).reshape(())
    be = jnp.asarray(beta, jnp.float32).reshape(())
    avec = jnp.full((C, 1), a, dtype=jnp.float32)
    bg = (be * gamma.astype(jnp.float32).reshape(C, 1))
    bb = (be * bias.astype(jnp.float32).reshape(C, 1))
    inv_count = 1.0 / float(N * L)

    vmem = pltpu.MemorySpace.VMEM
    return pl.pallas_call(
        _make_fused_kernel(N, float(eps), inv_count),
        out_shape=jax.ShapeDtypeStruct((N, C, L), x.dtype),
        in_specs=[pl.BlockSpec(memory_space=vmem)] * 4,
        out_specs=pl.BlockSpec(memory_space=vmem),
        compiler_params=pltpu.CompilerParams(vmem_limit_bytes=limit),
    )(avec, bg, bb, x)


def _two_pass_forward(x, gamma, bias, alpha, beta, eps, count, budget, limit):
    N, C, Lp = x.shape
    itemsize = jnp.dtype(x.dtype).itemsize
    tL = _pick_lane_tile(C, Lp, itemsize, budget)
    nB = _pick_batch_block(N, C, tL, itemsize, budget)
    fold = _pick_fold(tL)

    grid = (N // nB, Lp // tL)
    x_spec = pl.BlockSpec((nB, C, tL), lambda n, l: (n, 0, l))
    part_spec = pl.BlockSpec((None, C, 1), lambda n, l: (n, 0, 0))
    cvec_spec = pl.BlockSpec((C, 1), lambda n, l: (0, 0))

    # ---- Pass 1: per-batch-block partial sum / sum-of-squares ---------------
    sum_nc, ssq_nc = pl.pallas_call(
        _make_stats_kernel(nB, fold),
        out_shape=(jax.ShapeDtypeStruct((N // nB, C, 1), jnp.float32),
                   jax.ShapeDtypeStruct((N // nB, C, 1), jnp.float32)),
        grid_spec=pltpu.PrefetchScalarGridSpec(
            num_scalar_prefetch=0,
            grid=grid,
            in_specs=[x_spec],
            out_specs=[part_spec, part_spec],
            scratch_shapes=[pltpu.VMEM((C, tL // fold), jnp.float32),
                            pltpu.VMEM((C, tL // fold), jnp.float32)]),
        compiler_params=pltpu.CompilerParams(
            dimension_semantics=("parallel", "arbitrary"),
            vmem_limit_bytes=limit),
    )(x)

    # ---- O(C) wrapper: reduce partials, fold BN affine + alpha/beta ---------
    sum_c = jnp.sum(sum_nc, axis=0)                  # (C, 1)
    ssq_c = jnp.sum(ssq_nc, axis=0)                  # (C, 1)

    inv_count = jnp.float32(1.0 / count)             # exact double div, then f32
    mean = sum_c * inv_count
    var = jnp.maximum(ssq_c * inv_count - mean * mean, 0.0)  # biased (training)
    inv_std = lax.rsqrt(var + jnp.float32(eps))

    g = gamma.astype(jnp.float32).reshape(C, 1)
    b = bias.astype(jnp.float32).reshape(C, 1)
    a = jnp.asarray(alpha, jnp.float32).reshape(())
    be = jnp.asarray(beta, jnp.float32).reshape(())

    gs = g * inv_std
    scale = a + be * gs                              # (C, 1)
    shift = be * (b - mean * gs)                     # (C, 1)

    # ---- Pass 2: out = x * scale + shift  (one FMA/elem, fully parallel) ----
    out = pl.pallas_call(
        _make_apply_kernel(nB),
        out_shape=jax.ShapeDtypeStruct((N, C, Lp), x.dtype),
        grid_spec=pltpu.PrefetchScalarGridSpec(
            num_scalar_prefetch=0,
            grid=grid,
            in_specs=[x_spec, cvec_spec, cvec_spec],
            out_specs=x_spec),
        compiler_params=pltpu.CompilerParams(
            dimension_semantics=("parallel", "parallel"),
            vmem_limit_bytes=limit),
    )(x, scale, shift)
    return out


def adaptive_batch_norm_1d(x, gamma, bias, alpha, beta, *, eps=EPS,
                           allow_fused=True):
    """x: (N, C, L). Returns (N, C, L) in x.dtype (training-mode forward)."""
    N, C, L = x.shape
    itemsize = jnp.dtype(x.dtype).itemsize
    budget, limit = _vmem_budget()
    count = N * L

    # Fused resident path: read x once, write once.
    fused_bytes = N * C * L * (2 * itemsize + 12) + 16 * C
    if allow_fused and N <= 32 and fused_bytes <= budget:
        return _fused_forward(x, gamma, bias, alpha, beta, eps, limit)

    if L % 128 != 0:
        # Full-L lane blocks are the only legal option for unaligned L; if they
        # do not fit the budget, zero-pad L to a 128-multiple (padding does not
        # change the per-channel sums; we divide by the true count below).
        per_step = max(4 * C * L * itemsize, C * L * (2 * itemsize + 8))
        if per_step > budget:
            pad = (-L) % 128
            xp = jnp.pad(x, ((0, 0), (0, 0), (0, pad)))
            outp = _two_pass_forward(xp, gamma, bias, alpha, beta, eps,
                                     count, budget, limit)
            return outp[:, :, :L]

    return _two_pass_forward(x, gamma, bias, alpha, beta, eps,
                             count, budget, limit)


# --------------------------------------------------------------------------- #
# Reference + tests
# --------------------------------------------------------------------------- #
def _reference(x, gamma, bias, alpha, beta):
    xf = x.astype(jnp.float32)
    mean = jnp.mean(xf, axis=(0, 2), keepdims=True)
    var = jnp.mean((xf - mean) ** 2, axis=(0, 2), keepdims=True)
    norm = (xf - mean) / jnp.sqrt(var + EPS)
    norm = norm * gamma.reshape(1, -1, 1) + bias.reshape(1, -1, 1)
    return alpha * xf + beta * norm


if __name__ == "__main__":
    key = jax.random.PRNGKey(0)

    # --- Check 1: small NCL shape, default params, fused resident path -------
    N, C, L = 2, 4, 16
    x = jax.random.normal(key, (N, C, L), dtype=jnp.float32)
    gamma = jnp.ones((C,), dtype=jnp.float32)   # BatchNorm1d.weight init
    bias = jnp.zeros((C,), dtype=jnp.float32)   # BatchNorm1d.bias init
    alpha = jnp.float32(0.0)                    # nn.Parameter([0.0])
    beta = jnp.float32(1.0)                     # nn.Parameter([1.0])

    out = jax.block_until_ready(adaptive_batch_norm_1d(x, gamma, bias, alpha, beta))
    ref = _reference(x, gamma, bias, alpha, beta)
    assert out.shape == (N, C, L)
    assert jnp.allclose(out, ref, atol=1e-5, rtol=1e-5)

    # --- Check 2: same shape, forced two-pass path (unaligned full-L blocks) --
    out_b = jax.block_until_ready(
        adaptive_batch_norm_1d(x, gamma, bias, alpha, beta, allow_fused=False))
    assert jnp.allclose(out_b, ref, atol=1e-5, rtol=1e-5)

    # --- Checks 3+4: lane-dense 128-multiple path, nontrivial affine + alpha/beta
    N2, C2, L2 = 4, 8, 256
    k1, k2, k3 = jax.random.split(jax.random.PRNGKey(0), 3)
    x2 = jax.random.normal(k1, (N2, C2, L2), dtype=jnp.float32) * 2.0 + 0.5
    gamma2 = jax.random.normal(k2, (C2,), dtype=jnp.float32)
    bias2 = jax.random.normal(k3, (C2,), dtype=jnp.float32)
    alpha2 = jnp.float32(0.3)
    beta2 = jnp.float32(0.7)
    ref2 = _reference(x2, gamma2, bias2, alpha2, beta2)

    out2f = jax.block_until_ready(
        adaptive_batch_norm_1d(x2, gamma2, bias2, alpha2, beta2))           # fused
    out2s = jax.block_until_ready(
        adaptive_batch_norm_1d(x2, gamma2, bias2, alpha2, beta2,
                               allow_fused=False))                          # streaming
    assert out2f.shape == (N2, C2, L2)
    assert jnp.allclose(out2f, ref2, atol=1e-4, rtol=1e-4)
    assert jnp.allclose(out2s, ref2, atol=1e-4, rtol=1e-4)

    print("KERNEL_OK")
</pallas_src>

<mosaic_0001>
module attributes {stable_mosaic.version = 11 : i64} {
  func.func @kernel(%arg0: memref<4x1xf32, #tpu.memory_space<vmem>>, %arg1: memref<4x1xf32, #tpu.memory_space<vmem>>, %arg2: memref<4x1xf32, #tpu.memory_space<vmem>>, %arg3: memref<2x4x16xf32, #tpu.memory_space<vmem>>, %arg4: memref<2x4x16xf32, #tpu.memory_space<vmem>>) attributes {dimension_semantics = [], scalar_prefetch = 0 : i64, scratch_operands = 0 : i64, tpu.core_type = #tpu.core_type<tc>} {
    %c0 = arith.constant 0 : index
    %c0_0 = arith.constant 0 : index
    %c0_1 = arith.constant 0 : index
    %0 = vector.load %arg3[%c0, %c0_0, %c0_1] : memref<2x4x16xf32, #tpu.memory_space<vmem>>, vector<1x4x16xf32>
    %1 = vector.shape_cast %0 : vector<1x4x16xf32> to vector<4x16xf32>
    %2 = arith.mulf %1, %1 : vector<4x16xf32>
    %c1 = arith.constant 1 : index
    %c0_2 = arith.constant 0 : index
    %c0_3 = arith.constant 0 : index
    %3 = vector.load %arg3[%c1, %c0_2, %c0_3] : memref<2x4x16xf32, #tpu.memory_space<vmem>>, vector<1x4x16xf32>
    %4 = vector.shape_cast %3 : vector<1x4x16xf32> to vector<4x16xf32>
    %5 = arith.addf %1, %4 : vector<4x16xf32>
    %6 = arith.mulf %4, %4 : vector<4x16xf32>
    %7 = arith.addf %2, %6 : vector<4x16xf32>
    %cst = arith.constant dense<0.000000e+00> : vector<4xf32>
    %8 = vector.multi_reduction <add>, %5, %cst [1] : vector<4x16xf32> to vector<4xf32>
    %9 = vector.shape_cast %8 : vector<4xf32> to vector<4x1xf32>
    %cst_4 = arith.constant dense<0.000000e+00> : vector<4xf32>
    %10 = vector.multi_reduction <add>, %7, %cst_4 [1] : vector<4x16xf32> to vector<4xf32>
    %11 = vector.shape_cast %10 : vector<4xf32> to vector<4x1xf32>
    %cst_5 = arith.constant 3.125000e-02 : f32
    %12 = vector.broadcast %cst_5 : f32 to vector<4x1xf32>
    %13 = arith.mulf %9, %12 : vector<4x1xf32>
    %cst_6 = arith.constant 3.125000e-02 : f32
    %14 = vector.broadcast %cst_6 : f32 to vector<4x1xf32>
    %15 = arith.mulf %11, %14 : vector<4x1xf32>
    %16 = arith.mulf %13, %13 : vector<4x1xf32>
    %17 = arith.subf %15, %16 : vector<4x1xf32>
    %cst_7 = arith.constant 0.000000e+00 : f32
    %18 = vector.broadcast %cst_7 : f32 to vector<4x1xf32>
    %19 = arith.maximumf %17, %18 : vector<4x1xf32>
    %cst_8 = arith.constant 9.99999974E-6 : f32
    %20 = vector.broadcast %cst_8 : f32 to vector<4x1xf32>
    %21 = arith.addf %19, %20 : vector<4x1xf32>
    %22 = math.rsqrt %21 : vector<4x1xf32>
    %c0_9 = arith.constant 0 : index
    %c0_10 = arith.constant 0 : index
    %23 = vector.load %arg1[%c0_9, %c0_10] : memref<4x1xf32, #tpu.memory_space<vmem>>, vector<4x1xf32>
    %24 = arith.mulf %23, %22 : vector<4x1xf32>
    %c0_11 = arith.constant 0 : index
    %c0_12 = arith.constant 0 : index
    %25 = vector.load %arg0[%c0_11, %c0_12] : memref<4x1xf32, #tpu.memory_space<vmem>>, vector<4x1xf32>
    %26 = arith.addf %25, %24 : vector<4x1xf32>
    %c0_13 = arith.constant 0 : index
    %c0_14 = arith.constant 0 : index
    %27 = vector.load %arg2[%c0_13, %c0_14] : memref<4x1xf32, #tpu.memory_space<vmem>>, vector<4x1xf32>
    %28 = arith.mulf %13, %24 : vector<4x1xf32>
    %29 = arith.subf %27, %28 : vector<4x1xf32>
    %c0_15 = arith.constant 0 : index
    %c0_16 = arith.constant 0 : index
    %c0_17 = arith.constant 0 : index
    %30 = vector.load %arg3[%c0_15, %c0_16, %c0_17] : memref<2x4x16xf32, #tpu.memory_space<vmem>>, vector<1x4x16xf32>
    %31 = vector.shape_cast %30 : vector<1x4x16xf32> to vector<4x16xf32>
    %32 = vector.broadcast %26 : vector<4x1xf32> to vector<4x16xf32>
    %33 = arith.mulf %31, %32 : vector<4x16xf32>
    %34 = vector.broadcast %29 : vector<4x1xf32> to vector<4x16xf32>
    %35 = arith.addf %33, %34 : vector<4x16xf32>
    %c0_18 = arith.constant 0 : index
    %c0_19 = arith.constant 0 : index
    %c0_20 = arith.constant 0 : index
    %36 = vector.load %arg4[%c0_18, %c0_19, %c0_20] : memref<2x4x16xf32, #tpu.memory_space<vmem>>, vector<1x4x16xf32>
    %37 = vector.shape_cast %36 : vector<1x4x16xf32> to vector<4x16xf32>
    %38 = vector.shape_cast %35 : vector<4x16xf32> to vector<1x4x16xf32>
    tpu.vector_store %arg4[%c0_18, %c0_19, %c0_20], %38 {strides = array<i32>} : memref<2x4x16xf32, #tpu.memory_space<vmem>>, vector<1x4x16xf32>,
    %c1_21 = arith.constant 1 : index
    %c0_22 = arith.constant 0 : index
    %c0_23 = arith.constant 0 : index
    %39 = vector.load %arg3[%c1_21, %c0_22, %c0_23] : memref<2x4x16xf32, #tpu.memory_space<vmem>>, vector<1x4x16xf32>
    %40 = vector.shape_cast %39 : vector<1x4x16xf32> to vector<4x16xf32>
    %41 = vector.broadcast %26 : vector<4x1xf32> to vector<4x16xf32>
    %42 = arith.mulf %40, %41 : vector<4x16xf32>
    %43 = vector.broadcast %29 : vector<4x1xf32> to vector<4x16xf32>
    %44 = arith.addf %42, %43 : vector<4x16xf32>
    %c1_24 = arith.constant 1 : index
    %c0_25 = arith.constant 0 : index
    %c0_26 = arith.constant 0 : index
    %45 = vector.load %arg4[%c1_24, %c0_25, %c0_26] : memref<2x4x16xf32, #tpu.memory_space<vmem>>, vector<1x4x16xf32>
    %46 = vector.shape_cast %45 : vector<1x4x16xf32> to vector<4x16xf32>
    %47 = vector.shape_cast %44 : vector<4x16xf32> to vector<1x4x16xf32>
    tpu.vector_store %arg4[%c1_24, %c0_25, %c0_26], %47 {strides = array<i32>} : memref<2x4x16xf32, #tpu.memory_space<vmem>>, vector<1x4x16xf32>,
    return
  }
}

</mosaic_0001>

<llo_original>
// kernel: tpu_custom_call.1
$region0: #{tpu_custom_call.1}
  #allocation0 [shape = 'u32[]', space=smem, size = 0x4, offset = 0x4, fixed_abs, tag = 'smem constant byte address 0x4 - core index']
  #allocation1 [shape = 'u32[144,128]{1,0:T(1,128)}', space=vmem, size = 0x12000, scoped, tag = 'internal scratch']
  %s0 = inlined_call_operand.vmem [shape: f32[4,1], index: 0, kind: input, shape index: {}]
  %s1 = inlined_call_operand.vmem [shape: f32[4,1], index: 1, kind: input, shape index: {}]
  %s2 = inlined_call_operand.vmem [shape: f32[4,1], index: 2, kind: input, shape index: {}]
  %s3 = inlined_call_operand.vmem [shape: f32[2,4,16], index: 3, kind: input, shape index: {}]
  %s4 = inlined_call_operand.hbm [shape: f32[2,4,16], index: 4, kind: output, shape index: {}]
  %s5 = sld [smem:[#allocation0]]
  $region26: #{tpu_custom_call.1} parent=0
    _
  %s7 = ssub.s32 1, %s5
  %s8 = scalar_select 0, %s7, %s5
  $region1: #{tpu_custom_call.1} parent=0
    #allocation2 [shape = 'u8[4096]{0}', space=vmem, size = 0x1000, scoped, tag = 'output window, operand 0, single buffered']
    #allocation3 [shape = 's32[1]{0}', space=sflag, size = 0x4, scoped, tag = 'scoped memory for tpu_custom_call.1']
    %9 = vsyncpa [#allocation3], 0
    // Predicated region
    $region2: #{tpu_custom_call.1} parent=1 // pred_check
      _
    $region3: #{tpu_custom_call.1} parent=1 // pred_check_branch
      %11 = sbr.rel (0) target = $region5
    $region4: #{tpu_custom_call.1} parent=1 // pred_region
      _
    $region5: #{tpu_custom_call.1} parent=1 // pred_fallthru
      _
    // Predicated region
    $region6: #{tpu_custom_call.1} parent=1 // pred_check
      _
    $region7: #{tpu_custom_call.1} parent=1 // pred_check_branch
      %13 = sbr.rel (0) target = $region9
    $region8: #{tpu_custom_call.1} parent=1 // pred_region
      _
    $region9: #{tpu_custom_call.1} parent=1 // pred_fallthru
      _
    // Predicated region
    $region10: #{tpu_custom_call.1} parent=1 // pred_check
      _
    $region11: #{tpu_custom_call.1} parent=1 // pred_check_branch
      %15 = sbr.rel (0) target = $region13
    $region12: #{tpu_custom_call.1} parent=1 // pred_region
      _
    $region13: #{tpu_custom_call.1} parent=1 // pred_fallthru
      _
    // Predicated region
    $region14: #{tpu_custom_call.1} parent=1 // pred_check
      _
    $region15: #{tpu_custom_call.1} parent=1 // pred_check_branch
      %17 = sbr.rel (0) target = $region17
    $region16: #{tpu_custom_call.1} parent=1 // pred_region
      _
    $region17: #{tpu_custom_call.1} parent=1 // pred_fallthru
      _
    %v18 = vld [vmem:[%s3] sm:$0xf]
    %v19 = vmul.f32 %v18, %v18
    %s20 = scalar_lea.vmem %s3, 4
    %v21 = vld [vmem:[%s20] sm:$0xf]
    %v22 = vadd.f32 %v18, %v21
    %v23 = vmul.f32 %v21, %v21
    %v24 = vadd.f32 %v19, %v23
    %vm25 = vcmask 125952
    %v26 = vsel %vm25, %v22, 0.0
    %27 = vadd.xlane.f32.xlu0 %v26
    %v28 = vpop.xlane.xlu0 %27
    %v29 = vsel %vm25, %v24, 0.0
    %30 = vadd.xlane.f32.xlu0 %v29
    %v31 = vpop.xlane.xlu0 %30
    %v32 = vmul.f32 %v28, 0.03125
    %v33 = vmul.f32 %v31, 0.03125
    %v34 = vmul.f32 %v32, %v32
    %v35 = vsub.f32 %v33, %v34
    %v36 = vmax.f32 %v35, 0.0
    %v37 = vadd.f32 %v36, 1e-05
    %v38 = vrsqrt.pop %v37
    %v39 = vld [vmem:[%s1] sm:$0xf]
    %v40 = vmul.f32 %v39, %v38
    %v41 = vld [vmem:[%s0] sm:$0xf]
    %v42 = vadd.f32 %v41, %v40
    %v43 = vld [vmem:[%s2] sm:$0xf]
    %v44 = vmul.f32 %v32, %v40
    %v45 = vsub.f32 %v43, %v44
    %47 = vset.pattern.permute.xlu0 0
    %48 = vperm.xlu0 %47, %v42
    %v49 = vpop.permute.xlu0 %48
    %v51 = vmul.f32 %v18, %v49
    %53 = vset.pattern.permute.xlu0 0
    %54 = vperm.xlu0 %53, %v45
    %v55 = vpop.permute.xlu0 %54
    %v57 = vadd.f32 %v51, %v55
    %58 = vst.msk [vmem:[#allocation2] sm:$0xf] %vm25, %v57
    %v59 = vld [vmem:[%s20] sm:$0xf]
    %v60 = vmul.f32 %v59, %v49
    %v61 = vadd.f32 %v60, %v55
    %s62 = scalar_lea.vmem [#allocation2], 4
    %63 = vst.msk [vmem:[%s62] sm:$0xf] %vm25, %v61
    // Predicated region
    $region18: #{tpu_custom_call.1} parent=1 // pred_check
      _
    $region19: #{tpu_custom_call.1} parent=1 // pred_check_branch
      %65 = sbr.rel (0) target = $region21
    $region20: #{tpu_custom_call.1} parent=1 // pred_region
      %s67 = ssub.s32 128, 128
      %68 = vsyncadd [#allocation3], %s67
      %s69 = sshll.u32 [#allocation2], 4
      %s70 = int_to_ptr.vmem [resolvable:$true] %s69
      %75 = dma.vmem_to_hbm [thread:$0]  %s70, 128, %s4, [#allocation3], 64, 64, 4
    $region21: #{tpu_custom_call.1} parent=1 // pred_fallthru
      _
    // Predicated region
    $region22: #{tpu_custom_call.1} parent=1 // pred_check
      _
    $region23: #{tpu_custom_call.1} parent=1 // pred_check_branch
      %77 = sbr.rel (0) target = $region25
    $region24: #{tpu_custom_call.1} parent=1 // pred_region
      %78 = dma.done [#allocation3], 128
    $region25: #{tpu_custom_call.1} parent=1 // pred_fallthru
      _
    %79 = vsyncpa [#allocation3], 1

</llo_original>
